<compile_context>
chip_gen: v7x
topology: tpu7x:2x2x1
jax: 0.10.0
libtpu: 0.0.40
codegen_flags: <defaults>
</compile_context>

<pallas_src>
import math

import jax
import jax.numpy as jnp
from jax.experimental import pallas as pl
from jax.experimental.pallas import tpu as pltpu

_LANE = 128
_SUBLANE = 8


def _round_up(x: int, m: int) -> int:
    return ((x + m - 1) // m) * m


# ----------------------------------------------------------------------------- kernel
def _fused_mlp_kernel(x_ref, w_ref, out_ref):
    """Fused forward: h <- act(h @ W_l) for every fused layer.

    W_l is the padded block-diagonal fusion of every branch Linear at depth l
    (or the intermediate layer, or the fused actor+critic head), with the bias
    folded into row P-1 which is driven by a constant-1 lane of the activation.
    ReLU on every layer except the last (the fused heads).
    """
    x = x_ref[...]
    # torch: masked[x.isnan()] = 20.0 ; masked[x == 0.0] = 0.01  (disjoint masks)
    x = jnp.where(jnp.isnan(x), jnp.float32(20.0),
                  jnp.where(x == jnp.float32(0.0), jnp.float32(0.01), x))

    h = x
    num_layers = w_ref.shape[0]
    for l in range(num_layers):
        # bf16 operands at the MXU boundary only; accumulate in f32.
        z = jnp.dot(h.astype(w_ref.dtype), w_ref[l],
                    preferred_element_type=jnp.float32)
        if l < num_layers - 1:            # branch layers + intermediate use ReLU
            z = jnp.maximum(z, jnp.float32(0.0))
        h = z
    out_ref[...] = h


# -------------------------------------------------------------------- weight packing
def pack_params(params, input_sizes, hidden_layer_sizes, final_hidden, output_size,
                weights_dtype=jnp.bfloat16):
    """Pack PyTorch-layout params into one stacked, padded, block-diagonal buffer.

    Returns a single (num_layers, P, P) weight tensor. Lane P-1 is the constant-1
    bias lane: row P-1 of each layer carries that layer's bias, and W[P-1, P-1] = 1
    keeps the lane alive through intermediate layers.
    """
    num_branches = len(input_sizes)
    n_branch_layers = len(hidden_layer_sizes)

    in_width = sum(input_sizes)
    out_widths = [num_branches * h for h in hidden_layer_sizes]
    out_widths += [final_hidden, output_size + 1]          # intermediate, fused heads
    num_layers = n_branch_layers + 2

    # +1 guarantees lane P-1 is never a real data lane.
    P = _round_up(max([in_width] + out_widths) + 1, _LANE)
    bias_lane = P - 1

    W = jnp.zeros((num_layers, P, P), jnp.float32)

    # --- fused (block-diagonal) branch layers -------------------------------------
    for l in range(n_branch_layers):
        ins = (list(input_sizes) if l == 0
               else [hidden_layer_sizes[l - 1]] * num_branches)
        ro = co = 0
        for i in range(num_branches):
            w, b = params["branches"][i][l]          # torch layout: (out, in), (out,)
            w = jnp.asarray(w, jnp.float32)
            b = jnp.asarray(b, jnp.float32)
            out_i = w.shape[0]
            W = W.at[l, ro:ro + ins[i], co:co + out_i].set(w.T)
            W = W.at[l, bias_lane, co:co + out_i].set(b)
            ro += ins[i]
            co += out_i
        W = W.at[l, bias_lane, bias_lane].set(1.0)   # keep bias lane alive

    # --- intermediate layer ---------------------------------------------------------
    li = n_branch_layers
    w_int, b_int = params["intermediate"]            # (final_hidden, nb * H_last)
    w_int = jnp.asarray(w_int, jnp.float32)
    b_int = jnp.asarray(b_int, jnp.float32)
    W = W.at[li, :w_int.shape[1], :final_hidden].set(w_int.T)
    W = W.at[li, bias_lane, :final_hidden].set(b_int)
    W = W.at[li, bias_lane, bias_lane].set(1.0)

    # --- fused actor + critic heads ---------------------------------------------------
    lh = n_branch_layers + 1
    w_f, b_f = params["final"]                       # (output_size, final_hidden)
    w_c, b_c = params["critic"]                      # (1, final_hidden)
    w_head = jnp.concatenate([jnp.asarray(w_f, jnp.float32).T,
                              jnp.asarray(w_c, jnp.float32).T], axis=1)
    b_head = jnp.concatenate([jnp.asarray(b_f, jnp.float32),
                              jnp.asarray(b_c, jnp.float32)])
    W = W.at[lh, :final_hidden, :output_size + 1].set(w_head)
    W = W.at[lh, bias_lane, :output_size + 1].set(b_head)

    return {
        "weights": jax.device_put(W.astype(weights_dtype)),   # device-resident, once
        "pad": P,
        "num_layers": num_layers,
        "in_width": in_width,
        "output_size": output_size,
    }


# ----------------------------------------------------------------------------- forward
def make_forward(packed, batch=1, tile_m=_SUBLANE):
    """Build a jitted forward matching MultiBranchNet.forward.

    batch == 1 reproduces the PyTorch module exactly (returns squeezed
    (final, critic)); batch > 1 applies the same per-sample forward to each row.
    """
    P = packed["pad"]
    L = packed["num_layers"]
    in_width = packed["in_width"]
    output_size = packed["output_size"]
    b_pad = _round_up(max(batch, 1), tile_m)

    call = pl.pallas_call(
        _fused_mlp_kernel,
        out_shape=jax.ShapeDtypeStruct((b_pad, P), jnp.float32),
        grid=(b_pad // tile_m,),
        in_specs=[
            pl.BlockSpec((tile_m, P), lambda i: (i, 0)),       # batch tile of inputs
            pl.BlockSpec((L, P, P), lambda i: (0, 0, 0)),      # weights: resident
        ],
        out_specs=pl.BlockSpec((tile_m, P), lambda i: (i, 0)),
        compiler_params=pltpu.CompilerParams(
            dimension_semantics=("parallel",)),                # v7x: shard batch on 2 TCs
    )

    @jax.jit
    def fwd(branch_inputs, weights):
        parts = [jnp.asarray(v, jnp.float32).reshape(batch, -1)
                 for v in branch_inputs]
        x = jnp.concatenate(parts, axis=-1)                    # (batch, in_width)
        xp = jnp.zeros((b_pad, P), jnp.float32)
        xp = xp.at[:batch, :in_width].set(x)
        xp = xp.at[:, P - 1].set(1.0)                          # constant-1 bias lane
        out = call(xp, weights)
        final = out[:batch, :output_size]
        critic = out[:batch, output_size]
        if batch == 1:
            return jnp.squeeze(final[0]), jnp.squeeze(critic[0])
        return final, critic

    return fwd


# ------------------------------------------------------------------- params / reference
def init_params(key, input_sizes, hidden_layer_sizes, final_hidden, output_size):
    def linear(k, out_f, in_f):
        kw, kb = jax.random.split(k)
        bound = math.sqrt(6.0 / (in_f + out_f))
        w = jax.random.uniform(kw, (out_f, in_f), jnp.float32, -bound, bound)
        b = jax.random.uniform(kb, (out_f,), jnp.float32, 0.0, 0.2)
        return w, b

    keys = iter(jax.random.split(key, 64))
    branches = []
    for in_size in input_sizes:
        layers, prev = [], in_size
        for h in hidden_layer_sizes:
            layers.append(linear(next(keys), h, prev))
            prev = h
        branches.append(layers)
    comb = len(input_sizes) * hidden_layer_sizes[-1]
    return {
        "branches": branches,
        "intermediate": linear(next(keys), final_hidden, comb),
        "final": linear(next(keys), output_size, final_hidden),
        "critic": linear(next(keys), 1, final_hidden),
    }


def reference_forward(branch_inputs, params):
    """Pure-JAX f32 replica of the PyTorch forward (single sample)."""
    outs = []
    for i, x in enumerate(branch_inputs):
        x = jnp.asarray(x, jnp.float32)
        x = jnp.where(jnp.isnan(x), 20.0, jnp.where(x == 0.0, 0.01, x))
        h = x
        for (w, b) in params["branches"][i]:
            h = jnp.maximum(h @ w.T + b, 0.0)
        outs.append(h)
    comb = jnp.concatenate(outs)
    w_int, b_int = params["intermediate"]
    inter = jnp.maximum(comb @ w_int.T + b_int, 0.0)
    w_f, b_f = params["final"]
    w_c, b_c = params["critic"]
    final = inter @ w_f.T + b_f
    critic = inter @ w_c.T + b_c
    return jnp.squeeze(final), jnp.squeeze(critic)


# --------------------------------------------------------------------------------- main
if __name__ == "__main__":
    input_sizes = [10, 14, 12]
    hidden_layer_sizes = [32, 16]
    final_hidden_layer_size = 32
    output_size = 6

    key = jax.random.PRNGKey(0)
    kp, kx, kb = jax.random.split(key, 3)
    params = init_params(kp, input_sizes, hidden_layer_sizes,
                         final_hidden_layer_size, output_size)
    packed = pack_params(params, input_sizes, hidden_layer_sizes,
                         final_hidden_layer_size, output_size)

    # bf16 weights + bf16 MXU operands -> loosened tolerance vs. the f32 reference.
    ATOL, RTOL = 1e-1, 5e-2

    # ---- single-sample forward (exact PyTorch module semantics) ----------------------
    xkeys = jax.random.split(kx, len(input_sizes))
    inputs = [jax.random.normal(xkeys[i], (s,), jnp.float32)
              for i, s in enumerate(input_sizes)]
    inputs[0] = inputs[0].at[3].set(jnp.nan)     # exercise NaN -> 20.0 path
    inputs[1] = inputs[1].at[5].set(0.0)         # exercise 0   -> 0.01 path

    forward1 = make_forward(packed, batch=1)
    final_out, critic_out = jax.block_until_ready(forward1(inputs, packed["weights"]))

    ref_final, ref_critic = reference_forward(inputs, params)
    assert jnp.allclose(final_out, ref_final, atol=ATOL, rtol=RTOL), (final_out, ref_final)
    assert jnp.allclose(critic_out, ref_critic, atol=ATOL, rtol=RTOL), (critic_out, ref_critic)

    # ---- batched forward (amortizes weight DMA + MXU chain; parallel batch grid) -----
    B = 32
    bkeys = jax.random.split(kb, len(input_sizes))
    binputs = [jax.random.normal(bkeys[i], (B, s), jnp.float32)
               for i, s in enumerate(input_sizes)]
    binputs[0] = binputs[0].at[0, 2].set(jnp.nan)
    binputs[1] = binputs[1].at[3, 1].set(0.0)

    forward_b = make_forward(packed, batch=B)
    bf, bc = jax.block_until_ready(forward_b(binputs, packed["weights"]))

    for s in range(B):
        rf, rc = reference_forward([binputs[i][s] for i in range(len(input_sizes))],
                                   params)
        assert jnp.allclose(bf[s], rf, atol=ATOL, rtol=RTOL), (s, bf[s], rf)
        assert jnp.allclose(bc[s], rc, atol=ATOL, rtol=RTOL), (s, bc[s], rc)

    print("KERNEL_OK")
</pallas_src>

<mosaic_0001>
module attributes {stable_mosaic.version = 11 : i64} {
  func.func @_fused_mlp_kernel(%arg0: i32, %arg1: memref<8x128xf32, #tpu.memory_space<vmem>>, %arg2: memref<4x128x128xbf16, #tpu.memory_space<vmem>>, %arg3: memref<8x128xf32, #tpu.memory_space<vmem>>) attributes {dimension_semantics = [#tpu.dimension_semantics<parallel>], iteration_bounds = array<i64: 1>, scalar_prefetch = 0 : i64, scratch_operands = 0 : i64, tpu.core_type = #tpu.core_type<tc>, window_params = [{transform_indices = @transform_0, window_bounds = array<i64: 8, 128>}, {pipeline_mode = #tpu.pipeline_mode<synchronous>, transform_indices = @transform_1, window_bounds = array<i64: 4, 128, 128>}, {transform_indices = @transform_2, window_bounds = array<i64: 8, 128>}]} {
    %c0 = arith.constant 0 : index
    %c0_0 = arith.constant 0 : index
    %0 = vector.load %arg1[%c0, %c0_0] : memref<8x128xf32, #tpu.memory_space<vmem>>, vector<8x128xf32>
    %1 = arith.cmpf one, %0, %0 : vector<8x128xf32>
    %cst = arith.constant 0.000000e+00 : f32
    %2 = vector.broadcast %cst : f32 to vector<8x128xf32>
    %3 = arith.cmpf oeq, %0, %2 : vector<8x128xf32>
    %cst_1 = arith.constant 0.00999999977 : f32
    %4 = vector.broadcast %cst_1 : f32 to vector<8x128xf32>
    %5 = arith.select %3, %4, %0 : vector<8x128xi1>, vector<8x128xf32>
    %cst_2 = arith.constant 2.000000e+01 : f32
    %6 = vector.broadcast %cst_2 : f32 to vector<8x128xf32>
    %7 = arith.select %1, %6, %5 : vector<8x128xi1>, vector<8x128xf32>
    %8 = arith.truncf %7 : vector<8x128xf32> to vector<8x128xbf16>
    %c0_3 = arith.constant 0 : index
    %c0_4 = arith.constant 0 : index
    %c0_5 = arith.constant 0 : index
    %9 = vector.load %arg2[%c0_3, %c0_4, %c0_5] : memref<4x128x128xbf16, #tpu.memory_space<vmem>>, vector<1x128x128xbf16>
    %10 = vector.shape_cast %9 : vector<1x128x128xbf16> to vector<128x128xbf16>
    %cst_6 = arith.constant dense<0.000000e+00> : vector<8x128xf32>
    %11 = tpu.matmul %8, %10, %cst_6 {dimension_numbers = #tpu.dot_dimension_numbers<[1], [0], [0], [1], [0, 0, 1, 1], [], []>} : vector<8x128xbf16>, vector<128x128xbf16>, vector<8x128xf32> -> vector<8x128xf32>
    %cst_7 = arith.constant 0.000000e+00 : f32
    %12 = vector.broadcast %cst_7 : f32 to vector<8x128xf32>
    %13 = arith.maximumf %11, %12 : vector<8x128xf32>
    %14 = arith.truncf %13 : vector<8x128xf32> to vector<8x128xbf16>
    %c1 = arith.constant 1 : index
    %c0_8 = arith.constant 0 : index
    %c0_9 = arith.constant 0 : index
    %15 = vector.load %arg2[%c1, %c0_8, %c0_9] : memref<4x128x128xbf16, #tpu.memory_space<vmem>>, vector<1x128x128xbf16>
    %16 = vector.shape_cast %15 : vector<1x128x128xbf16> to vector<128x128xbf16>
    %cst_10 = arith.constant dense<0.000000e+00> : vector<8x128xf32>
    %17 = tpu.matmul %14, %16, %cst_10 {dimension_numbers = #tpu.dot_dimension_numbers<[1], [0], [0], [1], [0, 0, 1, 1], [], []>} : vector<8x128xbf16>, vector<128x128xbf16>, vector<8x128xf32> -> vector<8x128xf32>
    %cst_11 = arith.constant 0.000000e+00 : f32
    %18 = vector.broadcast %cst_11 : f32 to vector<8x128xf32>
    %19 = arith.maximumf %17, %18 : vector<8x128xf32>
    %20 = arith.truncf %19 : vector<8x128xf32> to vector<8x128xbf16>
    %c2 = arith.constant 2 : index
    %c0_12 = arith.constant 0 : index
    %c0_13 = arith.constant 0 : index
    %21 = vector.load %arg2[%c2, %c0_12, %c0_13] : memref<4x128x128xbf16, #tpu.memory_space<vmem>>, vector<1x128x128xbf16>
    %22 = vector.shape_cast %21 : vector<1x128x128xbf16> to vector<128x128xbf16>
    %cst_14 = arith.constant dense<0.000000e+00> : vector<8x128xf32>
    %23 = tpu.matmul %20, %22, %cst_14 {dimension_numbers = #tpu.dot_dimension_numbers<[1], [0], [0], [1], [0, 0, 1, 1], [], []>} : vector<8x128xbf16>, vector<128x128xbf16>, vector<8x128xf32> -> vector<8x128xf32>
    %cst_15 = arith.constant 0.000000e+00 : f32
    %24 = vector.broadcast %cst_15 : f32 to vector<8x128xf32>
    %25 = arith.maximumf %23, %24 : vector<8x128xf32>
    %26 = arith.truncf %25 : vector<8x128xf32> to vector<8x128xbf16>
    %c3 = arith.constant 3 : index
    %c0_16 = arith.constant 0 : index
    %c0_17 = arith.constant 0 : index
    %27 = vector.load %arg2[%c3, %c0_16, %c0_17] : memref<4x128x128xbf16, #tpu.memory_space<vmem>>, vector<1x128x128xbf16>
    %28 = vector.shape_cast %27 : vector<1x128x128xbf16> to vector<128x128xbf16>
    %cst_18 = arith.constant dense<0.000000e+00> : vector<8x128xf32>
    %29 = tpu.matmul %26, %28, %cst_18 {dimension_numbers = #tpu.dot_dimension_numbers<[1], [0], [0], [1], [0, 0, 1, 1], [], []>} : vector<8x128xbf16>, vector<128x128xbf16>, vector<8x128xf32> -> vector<8x128xf32>
    %c0_19 = arith.constant 0 : index
    %c0_20 = arith.constant 0 : index
    %30 = vector.load %arg3[%c0_19, %c0_20] : memref<8x128xf32, #tpu.memory_space<vmem>>, vector<8x128xf32>
    tpu.vector_store %arg3[%c0_19, %c0_20], %29 {strides = array<i32>} : memref<8x128xf32, #tpu.memory_space<vmem>>, vector<8x128xf32>,
    return
  }
  func.func @transform_0(%arg0: i32) -> (i32, i32) {
    %c0_i32 = arith.constant 0 : i32
    %c0_i32_0 = arith.constant 0 : i32
    return %arg0, %c0_i32 : i32, i32
  }
  func.func @transform_1(%arg0: i32) -> (i32, i32, i32) {
    %c0_i32 = arith.constant 0 : i32
    %c0_i32_0 = arith.constant 0 : i32
    %c0_i32_1 = arith.constant 0 : i32
    %c0_i32_2 = arith.constant 0 : i32
    return %c0_i32, %c0_i32_0, %c0_i32_1 : i32, i32, i32
  }
  func.func @transform_2(%arg0: i32) -> (i32, i32) {
    %c0_i32 = arith.constant 0 : i32
    %c0_i32_0 = arith.constant 0 : i32
    return %arg0, %c0_i32 : i32, i32
  }
}

</mosaic_0001>

<llo_original>
// kernel: fwd.1
$region0: #{fwd.1}
  #allocation0 [shape = 'u32[]', space=smem, size = 0x4, offset = 0x4, fixed_abs, tag = 'smem constant byte address 0x4 - core index']
  #allocation1 [shape = 'u32[144,128]{1,0:T(1,128)}', space=vmem, size = 0x12000, scoped, tag = 'internal scratch']
  %s0 = inlined_call_operand.vmem [shape: f32[8,128], index: 0, kind: input, shape index: {}]
  %s1 = inlined_call_operand.hbm [shape: bf16[4,128,128], index: 1, kind: input, shape index: {}]
  %s2 = inlined_call_operand.vmem [shape: f32[8,128], index: 2, kind: output, shape index: {}]
  %s3 = sld [smem:[#allocation0]]
  $region22: #{fwd.1} parent=0
    _
  %s5 = ssub.s32 1, %s3
  %s6 = scalar_select 0, %s5, %s3
  $region1: #{fwd.1} parent=0
    #allocation2 [shape = 'u8[131072]{0}', space=vmem, size = 0x20000, scoped, tag = 'input window, operand 1, single buffered']
    #allocation3 [shape = 's32[1]{0}', space=sflag, size = 0x4, scoped, tag = 'scoped memory for fwd.1']
    %7 = vsyncpa [#allocation3], 0
    // Predicated region
    $region2: #{fwd.1} parent=1 // pred_check
      _
    $region3: #{fwd.1} parent=1 // pred_check_branch
      %9 = sbr.rel (0) target = $region5
    $region4: #{fwd.1} parent=1 // pred_region
      _
    $region5: #{fwd.1} parent=1 // pred_fallthru
      _
    // Predicated region
    $region6: #{fwd.1} parent=1 // pred_check
      _
    $region7: #{fwd.1} parent=1 // pred_check_branch
      %11 = sbr.rel (0) target = $region9
    $region8: #{fwd.1} parent=1 // pred_region
      %s13 = ssub.s32 4096, 4096
      %14 = vsyncadd [#allocation3], %s13
      %s15 = sshll.u32 [#allocation2], 4
      %s16 = int_to_ptr.vmem [resolvable:$true] %s15
      %21 = dma.hbm_to_vmem [thread:$0]  %s1, 4096, %s16, [#allocation3], 64, 64, 4
    $region9: #{fwd.1} parent=1 // pred_fallthru
      _
    // Predicated region
    $region10: #{fwd.1} parent=1 // pred_check
      _
    $region11: #{fwd.1} parent=1 // pred_check_branch
      %23 = sbr.rel (0) target = $region13
    $region12: #{fwd.1} parent=1 // pred_region
      %24 = dma.done [#allocation3], 4096
    $region13: #{fwd.1} parent=1 // pred_fallthru
      _
    %v26 = vld [vmem:[%s0] sm:$0xff]
    %vm27 = vcmp.ne.f32.partialorder %v26, %v26
    %vm28 = vcmp.eq.f32.partialorder %v26, 0.0
    %v29 = vsel %vm28, 0.01, %v26
    %v30 = vsel %vm27, 20.0, %v29
    %v31 = vpack.c.bf16 %v30, %v30
    %v32 = vld [vmem:[#allocation2] sm:$0xf]
    %v33 = vld [vmem:[#allocation2 + $0x4] sm:$0xf]
    %v34 = vld [vmem:[#allocation2 + $0x8] sm:$0xf]
    %v35 = vld [vmem:[#allocation2 + $0xc] sm:$0xf]
    %v36 = vld [vmem:[#allocation2 + $0x10] sm:$0xf]
    %v37 = vld [vmem:[#allocation2 + $0x14] sm:$0xf]
    %v38 = vld [vmem:[#allocation2 + $0x18] sm:$0xf]
    %v39 = vld [vmem:[#allocation2 + $0x1c] sm:$0xf]
    %v40 = vld [vmem:[#allocation2 + $0x20] sm:$0xf]
    %v41 = vld [vmem:[#allocation2 + $0x24] sm:$0xf]
    %v42 = vld [vmem:[#allocation2 + $0x28] sm:$0xf]
    %v43 = vld [vmem:[#allocation2 + $0x2c] sm:$0xf]
    %v44 = vld [vmem:[#allocation2 + $0x30] sm:$0xf]
    %v45 = vld [vmem:[#allocation2 + $0x34] sm:$0xf]
    %v46 = vld [vmem:[#allocation2 + $0x38] sm:$0xf]
    %v47 = vld [vmem:[#allocation2 + $0x3c] sm:$0xf]
    %v64 = vunpack.c.l.b16 %v32
    %v65 = vunpack.c.l.b16 %v33
    %v66 = vunpack.c.l.b16 %v34
    %v67 = vunpack.c.l.b16 %v35
    %v68 = vunpack.c.l.b16 %v36
    %v69 = vunpack.c.l.b16 %v37
    %v70 = vunpack.c.l.b16 %v38
    %v71 = vunpack.c.l.b16 %v39
    %v72 = vunpack.c.l.b16 %v40
    %v73 = vunpack.c.l.b16 %v41
    %v74 = vunpack.c.l.b16 %v42
    %v75 = vunpack.c.l.b16 %v43
    %v76 = vunpack.c.l.b16 %v44
    %v77 = vunpack.c.l.b16 %v45
    %v78 = vunpack.c.l.b16 %v46
    %v79 = vunpack.c.l.b16 %v47
    %v80 = vpack.c.b16 %v65, %v64
    %v81 = vpack.c.b16 %v67, %v66
    %v82 = vpack.c.b16 %v69, %v68
    %v83 = vpack.c.b16 %v71, %v70
    %v84 = vpack.c.b16 %v73, %v72
    %v85 = vpack.c.b16 %v75, %v74
    %v86 = vpack.c.b16 %v77, %v76
    %v87 = vpack.c.b16 %v79, %v78
    %96 = vmatprep.subr.bf16.mxu0 0
    %97 = vmatpush1.bf16.msra.mxu0 %v80
    %98 = vmatprep.subr.bf16.mxu0 0
    %99 = vmatpush1.bf16.msra.mxu0 %v81
    %100 = vmatprep.subr.bf16.mxu0 0
    %101 = vmatpush1.bf16.msra.mxu0 %v82
    %102 = vmatprep.subr.bf16.mxu0 0
    %103 = vmatpush1.bf16.msra.mxu0 %v83
    %104 = vmatprep.subr.bf16.mxu0 0
    %105 = vmatpush1.bf16.msra.mxu0 %v84
    %106 = vmatprep.subr.bf16.mxu0 0
    %107 = vmatpush1.bf16.msra.mxu0 %v85
    %108 = vmatprep.subr.bf16.mxu0 0
    %109 = vmatpush1.bf16.msra.mxu0 %v86
    %110 = vmatprep.subr.bf16.mxu0 0
    %111 = vmatpush1.bf16.msra.mxu0 %v87
    %112 = vmatprep.subr.bf16.mxu0 0
    %113 = vmatpush1.bf16.msra.mxu0 0
    %114 = vmatprep.subr.bf16.mxu0 0
    %115 = vmatpush1.bf16.msra.mxu0 0
    %116 = vmatprep.subr.bf16.mxu0 0
    %117 = vmatpush1.bf16.msra.mxu0 0
    %118 = vmatprep.subr.bf16.mxu0 0
    %119 = vmatpush1.bf16.msra.mxu0 0
    %120 = vmatprep.subr.bf16.mxu0 0
    %121 = vmatpush1.bf16.msra.mxu0 0
    %122 = vmatprep.subr.bf16.mxu0 0
    %123 = vmatpush1.bf16.msra.mxu0 0
    %124 = vmatprep.subr.bf16.mxu0 0
    %125 = vmatpush1.bf16.msra.mxu0 0
    %126 = vmatprep.subr.bf16.mxu0 0
    %127 = vmatpush1.bf16.msra.mxu0 0
    %128 = vmatprep.mubr.bf16.mxu0 0
    %129 = vmatmul.mubr.bf16.gmra.mrb[0].mxu0 %v31
    %v130 = vpop.f32.mrb[0].mxu0
    %v131 = vadd.f32 0.0, %v130
    %v132 = vpop.f32.mrb[0].mxu0
    %v133 = vpop.f32.mrb[0].mxu0
    %v134 = vpop.f32.mrb[0].mxu0
    %135 = vdwg.mxu0
    %v136 = vmax.f32 %v131, 0.0
    %v137 = vpack.c.bf16 %v136, %v136
    %s138 = scalar_lea.vmem [#allocation2], 64
    %v139 = vld [vmem:[%s138] sm:$0xf]
    %v140 = vld [vmem:[%s138 + $0x4] sm:$0xf]
    %v141 = vld [vmem:[%s138 + $0x8] sm:$0xf]
    %v142 = vld [vmem:[%s138 + $0xc] sm:$0xf]
    %v143 = vld [vmem:[%s138 + $0x10] sm:$0xf]
    %v144 = vld [vmem:[%s138 + $0x14] sm:$0xf]
    %v145 = vld [vmem:[%s138 + $0x18] sm:$0xf]
    %v146 = vld [vmem:[%s138 + $0x1c] sm:$0xf]
    %v147 = vld [vmem:[%s138 + $0x20] sm:$0xf]
    %v148 = vld [vmem:[%s138 + $0x24] sm:$0xf]
    %v149 = vld [vmem:[%s138 + $0x28] sm:$0xf]
    %v150 = vld [vmem:[%s138 + $0x2c] sm:$0xf]
    %v151 = vld [vmem:[%s138 + $0x30] sm:$0xf]
    %v152 = vld [vmem:[%s138 + $0x34] sm:$0xf]
    %v153 = vld [vmem:[%s138 + $0x38] sm:$0xf]
    %v154 = vld [vmem:[%s138 + $0x3c] sm:$0xf]
    %v171 = vunpack.c.l.b16 %v139
    %v172 = vunpack.c.l.b16 %v140
    %v173 = vunpack.c.l.b16 %v141
    %v174 = vunpack.c.l.b16 %v142
    %v175 = vunpack.c.l.b16 %v143
    %v176 = vunpack.c.l.b16 %v144
    %v177 = vunpack.c.l.b16 %v145
    %v178 = vunpack.c.l.b16 %v146
    %v179 = vunpack.c.l.b16 %v147
    %v180 = vunpack.c.l.b16 %v148
    %v181 = vunpack.c.l.b16 %v149
    %v182 = vunpack.c.l.b16 %v150
    %v183 = vunpack.c.l.b16 %v151
    %v184 = vunpack.c.l.b16 %v152
    %v185 = vunpack.c.l.b16 %v153
    %v186 = vunpack.c.l.b16 %v154
    %v187 = vpack.c.b16 %v172, %v171
    %v188 = vpack.c.b16 %v174, %v173
    %v189 = vpack.c.b16 %v176, %v175
    %v190 = vpack.c.b16 %v178, %v177
    %v191 = vpack.c.b16 %v180, %v179
    %v192 = vpack.c.b16 %v182, %v181
    %v193 = vpack.c.b16 %v184, %v183
    %v194 = vpack.c.b16 %v186, %v185
    %203 = vmatprep.subr.bf16.mxu0 0
    %204 = vmatpush1.bf16.msra.mxu0 %v187
    %205 = vmatprep.subr.bf16.mxu0 0
    %206 = vmatpush1.bf16.msra.mxu0 %v188
    %207 = vmatprep.subr.bf16.mxu0 0
    %208 = vmatpush1.bf16.msra.mxu0 %v189
    %209 = vmatprep.subr.bf16.mxu0 0
    %210 = vmatpush1.bf16.msra.mxu0 %v190
    %211 = vmatprep.subr.bf16.mxu0 0
    %212 = vmatpush1.bf16.msra.mxu0 %v191
    %213 = vmatprep.subr.bf16.mxu0 0
    %214 = vmatpush1.bf16.msra.mxu0 %v192
    %215 = vmatprep.subr.bf16.mxu0 0
    %216 = vmatpush1.bf16.msra.mxu0 %v193
    %217 = vmatprep.subr.bf16.mxu0 0
    %218 = vmatpush1.bf16.msra.mxu0 %v194
    %219 = vmatprep.subr.bf16.mxu0 0
    %220 = vmatpush1.bf16.msra.mxu0 0
    %221 = vmatprep.subr.bf16.mxu0 0
    %222 = vmatpush1.bf16.msra.mxu0 0
    %223 = vmatprep.subr.bf16.mxu0 0
    %224 = vmatpush1.bf16.msra.mxu0 0
    %225 = vmatprep.subr.bf16.mxu0 0
    %226 = vmatpush1.bf16.msra.mxu0 0
    %227 = vmatprep.subr.bf16.mxu0 0
    %228 = vmatpush1.bf16.msra.mxu0 0
    %229 = vmatprep.subr.bf16.mxu0 0
    %230 = vmatpush1.bf16.msra.mxu0 0
    %231 = vmatprep.subr.bf16.mxu0 0
    %232 = vmatpush1.bf16.msra.mxu0 0
    %233 = vmatprep.subr.bf16.mxu0 0
    %234 = vmatpush1.bf16.msra.mxu0 0
    %235 = vmatprep.mubr.bf16.mxu0 0
    %236 = vmatmul.mubr.bf16.gmra.mrb[0].mxu0 %v137
    %v237 = vpop.f32.mrb[0].mxu0
    %v238 = vadd.f32 0.0, %v237
    %v239 = vpop.f32.mrb[0].mxu0
    %v240 = vpop.f32.mrb[0].mxu0
    %v241 = vpop.f32.mrb[0].mxu0
    %242 = vdwg.mxu0
    %v243 = vmax.f32 %v238, 0.0
    %v244 = vpack.c.bf16 %v243, %v243
    %s245 = scalar_lea.vmem [#allocation2], 128
    %v246 = vld [vmem:[%s245] sm:$0xf]
    %v247 = vld [vmem:[%s245 + $0x4] sm:$0xf]
    %v248 = vld [vmem:[%s245 + $0x8] sm:$0xf]
    %v249 = vld [vmem:[%s245 + $0xc] sm:$0xf]
    %v250 = vld [vmem:[%s245 + $0x10] sm:$0xf]
    %v251 = vld [vmem:[%s245 + $0x14] sm:$0xf]
    %v252 = vld [vmem:[%s245 + $0x18] sm:$0xf]
    %v253 = vld [vmem:[%s245 + $0x1c] sm:$0xf]
    %v254 = vld [vmem:[%s245 + $0x20] sm:$0xf]
    %v255 = vld [vmem:[%s245 + $0x24] sm:$0xf]
    %v256 = vld [vmem:[%s245 + $0x28] sm:$0xf]
    %v257 = vld [vmem:[%s245 + $0x2c] sm:$0xf]
    %v258 = vld [vmem:[%s245 + $0x30] sm:$0xf]
    %v259 = vld [vmem:[%s245 + $0x34] sm:$0xf]
    %v260 = vld [vmem:[%s245 + $0x38] sm:$0xf]
    %v261 = vld [vmem:[%s245 + $0x3c] sm:$0xf]
    %v278 = vunpack.c.l.b16 %v246
    %v279 = vunpack.c.l.b16 %v247
    %v280 = vunpack.c.l.b16 %v248
    %v281 = vunpack.c.l.b16 %v249
    %v282 = vunpack.c.l.b16 %v250
    %v283 = vunpack.c.l.b16 %v251
    %v284 = vunpack.c.l.b16 %v252
    %v285 = vunpack.c.l.b16 %v253
    %v286 = vunpack.c.l.b16 %v254
    %v287 = vunpack.c.l.b16 %v255
    %v288 = vunpack.c.l.b16 %v256
    %v289 = vunpack.c.l.b16 %v257
    %v290 = vunpack.c.l.b16 %v258
    %v291 = vunpack.c.l.b16 %v259
    %v292 = vunpack.c.l.b16 %v260
    %v293 = vunpack.c.l.b16 %v261
    %v294 = vpack.c.b16 %v279, %v278
    %v295 = vpack.c.b16 %v281, %v280
    %v296 = vpack.c.b16 %v283, %v282
    %v297 = vpack.c.b16 %v285, %v284
    %v298 = vpack.c.b16 %v287, %v286
    %v299 = vpack.c.b16 %v289, %v288
    %v300 = vpack.c.b16 %v291, %v290
    %v301 = vpack.c.b16 %v293, %v292
    %310 = vmatprep.subr.bf16.mxu0 0
    %311 = vmatpush1.bf16.msra.mxu0 %v294
    %312 = vmatprep.subr.bf16.mxu0 0
    %313 = vmatpush1.bf16.msra.mxu0 %v295
    %314 = vmatprep.subr.bf16.mxu0 0
    %315 = vmatpush1.bf16.msra.mxu0 %v296
    %316 = vmatprep.subr.bf16.mxu0 0
    %317 = vmatpush1.bf16.msra.mxu0 %v297
    %318 = vmatprep.subr.bf16.mxu0 0
    %319 = vmatpush1.bf16.msra.mxu0 %v298
    %320 = vmatprep.subr.bf16.mxu0 0
    %321 = vmatpush1.bf16.msra.mxu0 %v299
    %322 = vmatprep.subr.bf16.mxu0 0
    %323 = vmatpush1.bf16.msra.mxu0 %v300
    %324 = vmatprep.subr.bf16.mxu0 0
    %325 = vmatpush1.bf16.msra.mxu0 %v301
    %326 = vmatprep.subr.bf16.mxu0 0
    %327 = vmatpush1.bf16.msra.mxu0 0
    %328 = vmatprep.subr.bf16.mxu0 0
    %329 = vmatpush1.bf16.msra.mxu0 0
    %330 = vmatprep.subr.bf16.mxu0 0
    %331 = vmatpush1.bf16.msra.mxu0 0
    %332 = vmatprep.subr.bf16.mxu0 0
    %333 = vmatpush1.bf16.msra.mxu0 0
    %334 = vmatprep.subr.bf16.mxu0 0
    %335 = vmatpush1.bf16.msra.mxu0 0
    %336 = vmatprep.subr.bf16.mxu0 0
    %337 = vmatpush1.bf16.msra.mxu0 0
    %338 = vmatprep.subr.bf16.mxu0 0
    %339 = vmatpush1.bf16.msra.mxu0 0
    %340 = vmatprep.subr.bf16.mxu0 0
    %341 = vmatpush1.bf16.msra.mxu0 0
    %342 = vmatprep.mubr.bf16.mxu0 0
    %343 = vmatmul.mubr.bf16.gmra.mrb[0].mxu0 %v244
    %v344 = vpop.f32.mrb[0].mxu0
    %v345 = vadd.f32 0.0, %v344
    %v346 = vpop.f32.mrb[0].mxu0
    %v347 = vpop.f32.mrb[0].mxu0
    %v348 = vpop.f32.mrb[0].mxu0
    %349 = vdwg.mxu0
    %v350 = vmax.f32 %v345, 0.0
    %v351 = vpack.c.bf16 %v350, %v350
    %s352 = scalar_lea.vmem [#allocation2], 192
    %v353 = vld [vmem:[%s352] sm:$0xf]
    %v354 = vld [vmem:[%s352 + $0x4] sm:$0xf]
    %v355 = vld [vmem:[%s352 + $0x8] sm:$0xf]
    %v356 = vld [vmem:[%s352 + $0xc] sm:$0xf]
    %v357 = vld [vmem:[%s352 + $0x10] sm:$0xf]
    %v358 = vld [vmem:[%s352 + $0x14] sm:$0xf]
    %v359 = vld [vmem:[%s352 + $0x18] sm:$0xf]
    %v360 = vld [vmem:[%s352 + $0x1c] sm:$0xf]
    %v361 = vld [vmem:[%s352 + $0x20] sm:$0xf]
    %v362 = vld [vmem:[%s352 + $0x24] sm:$0xf]
    %v363 = vld [vmem:[%s352 + $0x28] sm:$0xf]
    %v364 = vld [vmem:[%s352 + $0x2c] sm:$0xf]
    %v365 = vld [vmem:[%s352 + $0x30] sm:$0xf]
    %v366 = vld [vmem:[%s352 + $0x34] sm:$0xf]
    %v367 = vld [vmem:[%s352 + $0x38] sm:$0xf]
    %v368 = vld [vmem:[%s352 + $0x3c] sm:$0xf]
    %v385 = vunpack.c.l.b16 %v353
    %v386 = vunpack.c.l.b16 %v354
    %v387 = vunpack.c.l.b16 %v355
    %v388 = vunpack.c.l.b16 %v356
    %v389 = vunpack.c.l.b16 %v357
    %v390 = vunpack.c.l.b16 %v358
    %v391 = vunpack.c.l.b16 %v359
    %v392 = vunpack.c.l.b16 %v360
    %v393 = vunpack.c.l.b16 %v361
    %v394 = vunpack.c.l.b16 %v362
    %v395 = vunpack.c.l.b16 %v363
    %v396 = vunpack.c.l.b16 %v364
    %v397 = vunpack.c.l.b16 %v365
    %v398 = vunpack.c.l.b16 %v366
    %v399 = vunpack.c.l.b16 %v367
    %v400 = vunpack.c.l.b16 %v368
    %v401 = vpack.c.b16 %v386, %v385
    %v402 = vpack.c.b16 %v388, %v387
    %v403 = vpack.c.b16 %v390, %v389
    %v404 = vpack.c.b16 %v392, %v391
    %v405 = vpack.c.b16 %v394, %v393
    %v406 = vpack.c.b16 %v396, %v395
    %v407 = vpack.c.b16 %v398, %v397
    %v408 = vpack.c.b16 %v400, %v399
    %417 = vmatprep.subr.bf16.mxu0 0
    %418 = vmatpush1.bf16.msra.mxu0 %v401
    %419 = vmatprep.subr.bf16.mxu0 0
    %420 = vmatpush1.bf16.msra.mxu0 %v402
    %421 = vmatprep.subr.bf16.mxu0 0
    %422 = vmatpush1.bf16.msra.mxu0 %v403
    %423 = vmatprep.subr.bf16.mxu0 0
    %424 = vmatpush1.bf16.msra.mxu0 %v404
    %425 = vmatprep.subr.bf16.mxu0 0
    %426 = vmatpush1.bf16.msra.mxu0 %v405
    %427 = vmatprep.subr.bf16.mxu0 0
    %428 = vmatpush1.bf16.msra.mxu0 %v406
    %429 = vmatprep.subr.bf16.mxu0 0
    %430 = vmatpush1.bf16.msra.mxu0 %v407
    %431 = vmatprep.subr.bf16.mxu0 0
    %432 = vmatpush1.bf16.msra.mxu0 %v408
    %433 = vmatprep.subr.bf16.mxu0 0
    %434 = vmatpush1.bf16.msra.mxu0 0
    %435 = vmatprep.subr.bf16.mxu0 0
    %436 = vmatpush1.bf16.msra.mxu0 0
    %437 = vmatprep.subr.bf16.mxu0 0
    %438 = vmatpush1.bf16.msra.mxu0 0
    %439 = vmatprep.subr.bf16.mxu0 0
    %440 = vmatpush1.bf16.msra.mxu0 0
    %441 = vmatprep.subr.bf16.mxu0 0
    %442 = vmatpush1.bf16.msra.mxu0 0
    %443 = vmatprep.subr.bf16.mxu0 0
    %444 = vmatpush1.bf16.msra.mxu0 0
    %445 = vmatprep.subr.bf16.mxu0 0
    %446 = vmatpush1.bf16.msra.mxu0 0
    %447 = vmatprep.subr.bf16.mxu0 0
    %448 = vmatpush1.bf16.msra.mxu0 0
    %449 = vmatprep.mubr.bf16.mxu0 0
    %450 = vmatmul.mubr.bf16.gmra.mrb[0].mxu0 %v351
    %v451 = vpop.f32.mrb[0].mxu0
    %v452 = vadd.f32 0.0, %v451
    %v453 = vpop.f32.mrb[0].mxu0
    %v454 = vpop.f32.mrb[0].mxu0
    %v455 = vpop.f32.mrb[0].mxu0
    %456 = vdwg.mxu0
    %457 = vst [vmem:[%s2] sm:$0xff] %v452
    // Predicated region
    $region14: #{fwd.1} parent=1 // pred_check
      _
    $region15: #{fwd.1} parent=1 // pred_check_branch
      %459 = sbr.rel (0) target = $region17
    $region16: #{fwd.1} parent=1 // pred_region
      _
    $region17: #{fwd.1} parent=1 // pred_fallthru
      _
    // Predicated region
    $region18: #{fwd.1} parent=1 // pred_check
      _
    $region19: #{fwd.1} parent=1 // pred_check_branch
      %461 = sbr.rel (0) target = $region21
    $region20: #{fwd.1} parent=1 // pred_region
      _
    $region21: #{fwd.1} parent=1 // pred_fallthru
      _
    %462 = vsyncpa [#allocation3], 1

</llo_original>
